<compile_context>
chip_gen: v5e
topology: v5e:2x2
jax: 0.10.0
libtpu: 0.0.40
codegen_flags: <defaults>
</compile_context>

<pallas_src>
import jax
import jax.numpy as jnp
from jax.experimental import pallas as pl
from jax.experimental.pallas import tpu as pltpu


def _round_up(x, m):
    return ((x + m - 1) // m) * m


# ---------------------------------------------------------------------------
# Kernel
# ---------------------------------------------------------------------------
def _cmsa_kernel(g_ref, x_ref, wg_ref, wx_ref, bsum_ref, wp_ref, bp_ref, out_ref):
    # Layout (channels on sublanes, spatial on lanes):
    #   g_ref:   (F_g, TS)       x_ref:   (F_l, TS)
    #   wg_ref:  (F_int, F_g)    wx_ref:  (F_int, F_l)
    #   bsum_ref:(F_int, 1)      wp_ref:  (1, F_int)
    #   bp_ref:  (1, 1)  in SMEM (scalar)
    #   out_ref: (F_l, TS)
    x_blk = x_ref[...]
    pre = (jnp.dot(wg_ref[...], g_ref[...], preferred_element_type=jnp.float32)
           + jnp.dot(wx_ref[...], x_blk, preferred_element_type=jnp.float32)
           + bsum_ref[...])                                        # (F_int, TS)
    p = jnp.maximum(pre, 0.0)
    logits = (jnp.dot(wp_ref[...], p, preferred_element_type=jnp.float32)
              + bp_ref[0, 0])                                      # (1, TS)
    psi = jax.nn.sigmoid(logits)                                   # (1, TS)
    # sublane-broadcast multiply, lane-dense full-width store (masked on the
    # ragged last block -- garbage lanes are never written back).
    out_ref[...] = (x_blk * psi).astype(out_ref.dtype)


# ---------------------------------------------------------------------------
# Tile / VMEM sizing helpers
# ---------------------------------------------------------------------------
def _vmem_capacity_bytes():
    try:
        return int(pltpu.get_tpu_info().vmem_capacity_bytes)
    except Exception:
        return 128 << 20  # conservative v5e/v6e assumption


def _choose_tile(S, F_g, F_l, F_int, tile_cap, vmem_cap):
    """Pick TS (lane tile) from a per-generation VMEM budget."""
    is_v7x_like = vmem_cap <= (64 << 20)        # v7x: 64 MiB physical VMEM per TC
    budget = (16 << 20) if is_v7x_like else (24 << 20)
    n_buf = 3 if is_v7x_like else 2             # deeper pipeline on v7x (fast HBM)
    # per-lane fp32 bytes: n_buf-buffered g/x/out streams + ~3 (F_int, TS) temps
    bytes_per_lane = 4 * (n_buf * (F_g + 2 * F_l) + 3 * F_int)
    ts_cap = min(int(tile_cap), budget // bytes_per_lane)
    ts_cap = max(128, (ts_cap // 128) * 128)
    if S <= ts_cap:
        ts = S          # single full-extent block along S (always a legal shape)
    else:
        ts = ts_cap     # 128-aligned tiles; ragged last block is masked by Pallas
    return ts, n_buf, bytes_per_lane, is_v7x_like


def _io_spec(block_shape, index_map, buffers):
    """BlockSpec for the streamed g/x/out slabs, optionally N-deep buffered."""
    if buffers != 2:
        try:
            return pl.BlockSpec(block_shape, index_map,
                                pipeline_mode=pl.Buffered(buffers))
        except Exception:
            pass  # older API: fall back to default double-buffering
    return pl.BlockSpec(block_shape, index_map)


# ---------------------------------------------------------------------------
# Wrapper
# ---------------------------------------------------------------------------
def cmsa_cs(g3, x3, params, *, tile_s=32768):
    """g3: (N, F_g, S), x3: (N, F_l, S) (channel-major, spatial-last)."""
    wg, bg, wx, bx, wp, bp = params
    N, F_g, S = g3.shape
    _, F_l, _ = x3.shape
    F_int = wg.shape[0]

    vmem_cap = _vmem_capacity_bytes()
    TS, n_buf, bytes_per_lane, is_v7x = _choose_tile(
        S, F_g, F_l, F_int, tile_s, vmem_cap)
    n_s_tiles = pl.cdiv(S, TS)

    # Fold the two conv biases into a single (F_int, 1) add.
    bsum = bg + bx
    # psi bias as a (1, 1) SMEM scalar.
    bp = bp.reshape(1, 1)

    # Scoped-VMEM limit derived from the actual footprint (with headroom),
    # capped well under physical VMEM on every generation.
    step_bytes = bytes_per_lane * TS
    vmem_limit = int(min(vmem_cap * 3 // 4,
                         max(2 * step_bytes + (4 << 20), 32 << 20)))

    # Grid: (N, S_tiles), both "parallel" (megacore shards either axis; the
    # inner S-tile axis keeps HBM access sequential within each batch slab).
    out = pl.pallas_call(
        _cmsa_kernel,
        out_shape=jax.ShapeDtypeStruct((N, F_l, S), x3.dtype),
        grid_spec=pltpu.PrefetchScalarGridSpec(
            num_scalar_prefetch=0,
            grid=(N, n_s_tiles),
            in_specs=[
                _io_spec((None, F_g, TS), lambda n, i: (n, 0, i), n_buf),
                _io_spec((None, F_l, TS), lambda n, i: (n, 0, i), n_buf),
                # Weights / folded bias: tiny, revisit block (0,0) => resident.
                pl.BlockSpec((F_int, F_g), lambda n, i: (0, 0)),
                pl.BlockSpec((F_int, F_l), lambda n, i: (0, 0)),
                pl.BlockSpec((F_int, 1), lambda n, i: (0, 0)),
                pl.BlockSpec((1, F_int), lambda n, i: (0, 0)),
                # psi bias scalar lives in SMEM (no (8,128)-padded VMEM tile).
                pl.BlockSpec(memory_space=pltpu.MemorySpace.SMEM),
            ],
            out_specs=_io_spec((None, F_l, TS), lambda n, i: (n, 0, i), n_buf),
        ),
        compiler_params=pltpu.CompilerParams(
            dimension_semantics=("parallel", "parallel"),
            vmem_limit_bytes=vmem_limit),
    )(g3, x3, wg, wx, bsum, wp, bp)
    return out


def cmsa_forward(g, x, params, *, tile_s=32768):
    """g: (N, F_g, D, H, W), x: (N, F_l, D, H, W) in NCDHW (PyTorch layout)."""
    N, F_g, D, H, W = g.shape
    _, F_l = x.shape[:2]
    S = D * H * W
    # NCDHW is already channel-major: a free reshape yields the (C, S) slabs.
    g3 = g.reshape(N, F_g, S)
    x3 = x.reshape(N, F_l, S)
    out3 = cmsa_cs(g3, x3, params, tile_s=tile_s)
    return out3.reshape(N, F_l, D, H, W)


def make_params(key, F_g, F_l, F_int):
    """PyTorch Conv3d-style layouts: weight (C_out, C_in), bias column (C_out, 1)."""
    ks = jax.random.split(key, 6)
    wg = jax.random.normal(ks[0], (F_int, F_g), jnp.float32) * 0.1
    bg = jax.random.normal(ks[1], (F_int, 1), jnp.float32) * 0.1
    wx = jax.random.normal(ks[2], (F_int, F_l), jnp.float32) * 0.1
    bx = jax.random.normal(ks[3], (F_int, 1), jnp.float32) * 0.1
    wp = jax.random.normal(ks[4], (1, F_int), jnp.float32) * 0.1  # F_int -> 1
    bp = jax.random.normal(ks[5], (1, 1), jnp.float32) * 0.1
    return (wg, bg, wx, bx, wp, bp)


def cmsa_reference(g, x, params):
    """Pure-JAX reference matching the PyTorch forward (NCDHW)."""
    wg, bg, wx, bx, wp, bp = params
    g1 = jnp.einsum('kc,ncdhw->nkdhw', wg, g) + bg[:, 0][None, :, None, None, None]
    x1 = jnp.einsum('kc,ncdhw->nkdhw', wx, x) + bx[:, 0][None, :, None, None, None]
    p = jnp.maximum(g1 + x1, 0.0)
    logits = jnp.einsum('k,nkdhw->ndhw', wp[0], p) + bp[0, 0]
    psi = jax.nn.sigmoid(logits)[:, None]  # (N, 1, D, H, W)
    return x * psi


if __name__ == "__main__":
    key = jax.random.PRNGKey(0)
    k_g, k_x, k_p = jax.random.split(key, 3)

    N, F_g, F_l, F_int = 2, 4, 4, 8
    D, H, W = 4, 8, 8  # S per batch element = 256

    g = jax.random.normal(k_g, (N, F_g, D, H, W), jnp.float32)
    x = jax.random.normal(k_x, (N, F_l, D, H, W), jnp.float32)
    params = make_params(k_p, F_g, F_l, F_int)

    # Main run: single full-extent S block per batch element.
    out = cmsa_forward(g, x, params)
    out = jax.block_until_ready(out)
    ref = cmsa_reference(g, x, params)
    assert out.shape == x.shape
    assert jnp.allclose(out, ref, atol=1e-5, rtol=1e-5)

    # Ragged-last-block path (S=256, TS=128 overridden via tile_s): no wrapper
    # padding, Pallas masks the partial block.
    g2 = jax.random.normal(jax.random.PRNGKey(1), (1, F_g, 3, 8, 8), jnp.float32)
    x2 = jax.random.normal(jax.random.PRNGKey(2), (1, F_l, 3, 8, 8), jnp.float32)
    out2 = jax.block_until_ready(cmsa_forward(g2, x2, params, tile_s=128))
    assert jnp.allclose(out2, cmsa_reference(g2, x2, params), atol=1e-5, rtol=1e-5)

    print("KERNEL_OK")
</pallas_src>

<mosaic_0001>
module attributes {stable_mosaic.version = 11 : i64} {
  func.func @_cmsa_kernel(%arg0: i32, %arg1: i32, %arg2: memref<1x4x256xf32, #tpu.memory_space<vmem>>, %arg3: memref<1x4x256xf32, #tpu.memory_space<vmem>>, %arg4: memref<8x4xf32, #tpu.memory_space<vmem>>, %arg5: memref<8x4xf32, #tpu.memory_space<vmem>>, %arg6: memref<8x1xf32, #tpu.memory_space<vmem>>, %arg7: memref<1x8xf32, #tpu.memory_space<vmem>>, %arg8: memref<1x1xf32, #tpu.memory_space<smem>>, %arg9: memref<1x4x256xf32, #tpu.memory_space<vmem>>) attributes {dimension_semantics = [#tpu.dimension_semantics<parallel>, #tpu.dimension_semantics<parallel>], iteration_bounds = array<i64: 2, 1>, scalar_prefetch = 0 : i64, scratch_operands = 0 : i64, tpu.core_type = #tpu.core_type<tc>, window_params = [{transform_indices = @transform_0, window_bounds = array<i64: 1, 4, 256>}, {transform_indices = @transform_1, window_bounds = array<i64: 1, 4, 256>}, {pipeline_mode = #tpu.pipeline_mode<synchronous>, transform_indices = @transform_2, window_bounds = array<i64: 8, 4>}, {pipeline_mode = #tpu.pipeline_mode<synchronous>, transform_indices = @transform_3, window_bounds = array<i64: 8, 4>}, {pipeline_mode = #tpu.pipeline_mode<synchronous>, transform_indices = @transform_4, window_bounds = array<i64: 8, 1>}, {pipeline_mode = #tpu.pipeline_mode<synchronous>, transform_indices = @transform_5, window_bounds = array<i64: 1, 8>}, {transform_indices = @transform_6, window_bounds = array<i64: 1, 1>}, {transform_indices = @transform_7, window_bounds = array<i64: 1, 4, 256>}]} {
    %c0 = arith.constant 0 : index
    %c0_0 = arith.constant 0 : index
    %c0_1 = arith.constant 0 : index
    %0 = vector.load %arg3[%c0, %c0_0, %c0_1] : memref<1x4x256xf32, #tpu.memory_space<vmem>>, vector<1x4x256xf32>
    %1 = vector.shape_cast %0 : vector<1x4x256xf32> to vector<4x256xf32>
    %c0_2 = arith.constant 0 : index
    %c0_3 = arith.constant 0 : index
    %2 = vector.load %arg4[%c0_2, %c0_3] : memref<8x4xf32, #tpu.memory_space<vmem>>, vector<8x4xf32>
    %c0_4 = arith.constant 0 : index
    %c0_5 = arith.constant 0 : index
    %c0_6 = arith.constant 0 : index
    %3 = vector.load %arg2[%c0_4, %c0_5, %c0_6] : memref<1x4x256xf32, #tpu.memory_space<vmem>>, vector<1x4x256xf32>
    %4 = vector.shape_cast %3 : vector<1x4x256xf32> to vector<4x256xf32>
    %cst = arith.constant dense<0.000000e+00> : vector<8x256xf32>
    %5 = tpu.matmul %2, %4, %cst {dimension_numbers = #tpu.dot_dimension_numbers<[1], [0], [0], [1], [0, 0, 1, 1], [], []>} : vector<8x4xf32>, vector<4x256xf32>, vector<8x256xf32> -> vector<8x256xf32>
    %c0_7 = arith.constant 0 : index
    %c0_8 = arith.constant 0 : index
    %6 = vector.load %arg5[%c0_7, %c0_8] : memref<8x4xf32, #tpu.memory_space<vmem>>, vector<8x4xf32>
    %cst_9 = arith.constant dense<0.000000e+00> : vector<8x256xf32>
    %7 = tpu.matmul %6, %1, %cst_9 {dimension_numbers = #tpu.dot_dimension_numbers<[1], [0], [0], [1], [0, 0, 1, 1], [], []>} : vector<8x4xf32>, vector<4x256xf32>, vector<8x256xf32> -> vector<8x256xf32>
    %8 = arith.addf %5, %7 : vector<8x256xf32>
    %c0_10 = arith.constant 0 : index
    %c0_11 = arith.constant 0 : index
    %9 = vector.load %arg6[%c0_10, %c0_11] : memref<8x1xf32, #tpu.memory_space<vmem>>, vector<8x1xf32>
    %10 = vector.broadcast %9 : vector<8x1xf32> to vector<8x256xf32>
    %11 = arith.addf %8, %10 : vector<8x256xf32>
    %cst_12 = arith.constant 0.000000e+00 : f32
    %12 = vector.broadcast %cst_12 : f32 to vector<8x256xf32>
    %13 = arith.maximumf %11, %12 : vector<8x256xf32>
    %c0_13 = arith.constant 0 : index
    %c0_14 = arith.constant 0 : index
    %14 = vector.load %arg7[%c0_13, %c0_14] : memref<1x8xf32, #tpu.memory_space<vmem>>, vector<1x8xf32>
    %cst_15 = arith.constant dense<0.000000e+00> : vector<1x256xf32>
    %15 = tpu.matmul %14, %13, %cst_15 {dimension_numbers = #tpu.dot_dimension_numbers<[1], [0], [0], [1], [0, 0, 1, 1], [], []>} : vector<1x8xf32>, vector<8x256xf32>, vector<1x256xf32> -> vector<1x256xf32>
    %c0_16 = arith.constant 0 : index
    %c0_17 = arith.constant 0 : index
    %16 = memref.load %arg8[%c0_16, %c0_17] : memref<1x1xf32, #tpu.memory_space<smem>>
    %17 = vector.broadcast %16 : f32 to vector<1x256xf32>
    %18 = arith.addf %15, %17 : vector<1x256xf32>
    %19 = arith.negf %18 : vector<1x256xf32>
    %20 = math.exp %19 : vector<1x256xf32>
    %cst_18 = arith.constant 1.000000e+00 : f32
    %21 = vector.broadcast %cst_18 : f32 to vector<1x256xf32>
    %22 = arith.addf %21, %20 : vector<1x256xf32>
    %23 = arith.divf %21, %22 : vector<1x256xf32>
    %24 = vector.broadcast %23 : vector<1x256xf32> to vector<4x256xf32>
    %25 = arith.mulf %1, %24 : vector<4x256xf32>
    %c0_19 = arith.constant 0 : index
    %c0_20 = arith.constant 0 : index
    %c0_21 = arith.constant 0 : index
    %26 = vector.load %arg9[%c0_19, %c0_20, %c0_21] : memref<1x4x256xf32, #tpu.memory_space<vmem>>, vector<1x4x256xf32>
    %27 = vector.shape_cast %26 : vector<1x4x256xf32> to vector<4x256xf32>
    %28 = vector.shape_cast %25 : vector<4x256xf32> to vector<1x4x256xf32>
    tpu.vector_store %arg9[%c0_19, %c0_20, %c0_21], %28 {strides = array<i32>} : memref<1x4x256xf32, #tpu.memory_space<vmem>>, vector<1x4x256xf32>,
    return
  }
  func.func @transform_0(%arg0: i32, %arg1: i32) -> (i32, i32, i32) {
    %c0_i32 = arith.constant 0 : i32
    %c0_i32_0 = arith.constant 0 : i32
    return %arg0, %c0_i32, %arg1 : i32, i32, i32
  }
  func.func @transform_1(%arg0: i32, %arg1: i32) -> (i32, i32, i32) {
    %c0_i32 = arith.constant 0 : i32
    %c0_i32_0 = arith.constant 0 : i32
    return %arg0, %c0_i32, %arg1 : i32, i32, i32
  }
  func.func @transform_2(%arg0: i32, %arg1: i32) -> (i32, i32) {
    %c0_i32 = arith.constant 0 : i32
    %c0_i32_0 = arith.constant 0 : i32
    %c0_i32_1 = arith.constant 0 : i32
    return %c0_i32, %c0_i32_0 : i32, i32
  }
  func.func @transform_3(%arg0: i32, %arg1: i32) -> (i32, i32) {
    %c0_i32 = arith.constant 0 : i32
    %c0_i32_0 = arith.constant 0 : i32
    %c0_i32_1 = arith.constant 0 : i32
    return %c0_i32, %c0_i32_0 : i32, i32
  }
  func.func @transform_4(%arg0: i32, %arg1: i32) -> (i32, i32) {
    %c0_i32 = arith.constant 0 : i32
    %c0_i32_0 = arith.constant 0 : i32
    %c0_i32_1 = arith.constant 0 : i32
    return %c0_i32, %c0_i32_0 : i32, i32
  }
  func.func @transform_5(%arg0: i32, %arg1: i32) -> (i32, i32) {
    %c0_i32 = arith.constant 0 : i32
    %c0_i32_0 = arith.constant 0 : i32
    %c0_i32_1 = arith.constant 0 : i32
    return %c0_i32, %c0_i32_0 : i32, i32
  }
  func.func @transform_6(%arg0: i32, %arg1: i32) -> (i32, i32) {
    %c0_i32 = arith.constant 0 : i32
    %c0_i32_0 = arith.constant 0 : i32
    %c0_i32_1 = arith.constant 0 : i32
    return %c0_i32, %c0_i32_0 : i32, i32
  }
  func.func @transform_7(%arg0: i32, %arg1: i32) -> (i32, i32, i32) {
    %c0_i32 = arith.constant 0 : i32
    %c0_i32_0 = arith.constant 0 : i32
    return %arg0, %c0_i32, %arg1 : i32, i32, i32
  }
}

</mosaic_0001>

<llo_original>
// kernel: tpu_custom_call.1
$region0: #{tpu_custom_call.1}
  #allocation0 [shape = 'u32[]', space=smem, size = 0x4, offset = 0x4, fixed_abs, tag = 'smem constant byte address 0x4 - core index']
  #allocation1 [shape = 'u32[72,128]{1,0:T(1,128)}', space=vmem, size = 0x9000, scoped, tag = 'internal scratch']
  #allocation2 [shape = 'f32[1,1]{1,0:T(1,128)S(6)}', space=smem, size = 0x200, scoped, tag = 'scoped memory for tpu_custom_call.1']
  %s0 = inlined_call_operand.vmem [shape: f32[2,4,256], index: 0, kind: input, shape index: {}]
  %s1 = inlined_call_operand.hbm [shape: f32[2,4,256], index: 1, kind: input, shape index: {}]
  %s2 = inlined_call_operand.vmem [shape: f32[8,4], index: 2, kind: input, shape index: {}]
  %s3 = inlined_call_operand.vmem [shape: f32[8,4], index: 3, kind: input, shape index: {}]
  %s4 = inlined_call_operand.vmem [shape: f32[8,1], index: 4, kind: input, shape index: {}]
  %s5 = inlined_call_operand.vmem [shape: f32[1,8], index: 5, kind: input, shape index: {}]
  %s6 = inlined_call_operand.<no memory space> [shape: f32[1,1], index: 6, kind: input, shape index: {}]
  %s7 = inlined_call_operand.hbm [shape: f32[2,4,256], index: 7, kind: output, shape index: {}]
  %s8 = sld [smem:[#allocation0]]
  $region65: #{tpu_custom_call.1} parent=0
    _
  %s10 = ssub.s32 1, %s8
  %s11 = scalar_select 0, %s10, %s8
  %12 = sst [smem:[#allocation2]] %s6
  $region1: #{tpu_custom_call.1} parent=0
    #allocation3 [shape = 'u8[8192]{0}', space=vmem, size = 0x2000, scoped, tag = 'input window, operand 1']
    #allocation4 [shape = 's32[2]{0}', space=sflag, size = 0x8, scoped, tag = 'scoped memory for tpu_custom_call.1']
    #allocation5 [shape = 's32[2]{0}', space=sflag, size = 0x8, scoped, tag = 'scoped memory for tpu_custom_call.1']
    #allocation6 [shape = 'u8[8192]{0}', space=vmem, size = 0x2000, scoped, tag = 'output window, operand 0']
    %13 = vsyncpa [#allocation4], 0
    %s14 = scalar_lea.sflag [#allocation4], 1
    %15 = vsyncpa %s14, 0
    %16 = vsyncpa [#allocation5], 0
    %s17 = scalar_lea.sflag [#allocation5], 1
    %18 = vsyncpa %s17, 0
    loop: start=0, step=1, limit=4
    $region2: #{tpu_custom_call.1} parent=1 // loop_pre_header
      _
    $region3: #{tpu_custom_call.1} parent=1 // loop_header
      %s20 = sphi 0, %s24
      %p21 = scmp.ge.s32.totalorder %s20, 4
      %s27 = sphi 0, %s39
      %s28 = sphi 0, %s35
      %s29 = sphi 0, %s27
      %s30 = sphi 0, %s28
      %s31 = sphi 0, %s29
      %s32 = sphi 0, %s30
      %s44 = sphi 0, %s46
      %s47 = sphi 0, %s44
      %s48 = sphi 0, %s47
      %s64 = sphi 0, %s48
      %s72 = sphi 0, %s74
      %s75 = sphi 0, %s72
      %s76 = sphi 0, %s75
      %s92 = sphi 0, %s76
      %s96 = sphi 0, %s96
      %s98 = sphi 0, %s96
      %s99 = sphi 0, %s98
      %s113 = sphi 0, %s99
      %s117 = sphi 0, %s117
      %s119 = sphi 0, %s117
      %s120 = sphi 0, %s119
      %s134 = sphi 0, %s120
      %s138 = sphi 0, %s138
      %s140 = sphi 0, %s138
      %s141 = sphi 0, %s140
      %s155 = sphi 0, %s141
      %s159 = sphi 0, %s159
      %s161 = sphi 0, %s159
      %s162 = sphi 0, %s161
      %s176 = sphi 0, %s162
      %s180 = sphi 0, %s180
      %s182 = sphi 0, %s180
      %s183 = sphi 0, %s182
      %s197 = sphi 0, %s183
      %s205 = sphi 0, %s207
      %s208 = sphi 0, %s205
      %s209 = sphi 0, %s208
      %s225 = sphi 0, %s209
    $region4: #{tpu_custom_call.1} parent=1 // loop_header_branch
      %23 = sbr.rel (%p21) target = $region8
    $region5: #{tpu_custom_call.1} parent=1 // loop_body
      %s25 = ssub.s32 %s20, 1
      %s26 = ssub.s32 %s20, 2
      %s33 = sadd.s32 1, %s28
      %p34 = scmp.ge.s32.totalorder %s33, 1
      %s35 = scalar_select %p34, 0, %s33
      %s36 = sadd.s32 1, %s27
      %s37 = scalar_select %p34, %s36, %s27
      %p38 = scmp.ge.s32.totalorder %s37, 2
      %s39 = scalar_select %p38, 0, %s37
      %s40 = ssub.s32 %s27, %s39
      %s41 = ssub.s32 %s28, %s35
      %s42 = sor.u32 %s40, %s41
      %p43 = scmp.eq.s32.totalorder %s42, 0
      %s45 = sadd.s32 %s44, 1
      %s46 = scalar_select %p43, %s44, %s45
      %p49 = pneg %p43
      %p50 = scmp.eq.s32.totalorder %s20, 1
      %p51 = por %p49, %p50
      %p52 = scmp.ne.s32.totalorder %s44, %s47
      %p53 = scmp.eq.s32.totalorder %s20, 0
      %p54 = por %p52, %p53
      %p55 = scmp.ne.s32.totalorder %s44, %s47
      %p56 = scmp.eq.s32.totalorder %s25, 1
      %p57 = por %p55, %p56
      %p58 = scmp.ne.s32.totalorder %s47, %s48
      %p59 = scmp.eq.s32.totalorder %s25, 0
      %p60 = por %p58, %p59
      %p61 = scmp.ne.s32.totalorder %s47, %s48
      %p62 = scmp.eq.s32.totalorder %s26, 1
      %p63 = por %p61, %p62
      %p65 = scmp.ne.s32.totalorder %s48, %s64
      %p66 = scmp.eq.s32.totalorder %s26, 0
      %p67 = por %p65, %p66
      %s68 = ssub.s32 %s27, %s39
      %s69 = ssub.s32 %s28, %s35
      %s70 = sor.u32 %s68, %s69
      %p71 = scmp.eq.s32.totalorder %s70, 0
      %s73 = sadd.s32 %s72, 1
      %s74 = scalar_select %p71, %s72, %s73
      %p77 = pneg %p71
      %p78 = scmp.eq.s32.totalorder %s20, 1
      %p79 = por %p77, %p78
      %p80 = scmp.ne.s32.totalorder %s72, %s75
      %p81 = scmp.eq.s32.totalorder %s20, 0
      %p82 = por %p80, %p81
      %p83 = scmp.ne.s32.totalorder %s72, %s75
      %p84 = scmp.eq.s32.totalorder %s25, 1
      %p85 = por %p83, %p84
      %p86 = scmp.ne.s32.totalorder %s75, %s76
      %p87 = scmp.eq.s32.totalorder %s25, 0
      %p88 = por %p86, %p87
      %p89 = scmp.ne.s32.totalorder %s75, %s76
      %p90 = scmp.eq.s32.totalorder %s26, 1
      %p91 = por %p89, %p90
      %p93 = scmp.ne.s32.totalorder %s76, %s92
      %p94 = scmp.eq.s32.totalorder %s26, 0
      %p95 = por %p93, %p94
      %s97 = sadd.s32 %s96, 1
      %p100 = scmp.eq.s32.totalorder %s20, 1
      %p101 = scmp.ne.s32.totalorder %s96, %s98
      %p102 = scmp.eq.s32.totalorder %s20, 0
      %p103 = por %p101, %p102
      %p104 = scmp.ne.s32.totalorder %s96, %s98
      %p105 = scmp.eq.s32.totalorder %s25, 1
      %p106 = por %p104, %p105
      %p107 = scmp.ne.s32.totalorder %s98, %s99
      %p108 = scmp.eq.s32.totalorder %s25, 0
      %p109 = por %p107, %p108
      %p110 = scmp.ne.s32.totalorder %s98, %s99
      %p111 = scmp.eq.s32.totalorder %s26, 1
      %p112 = por %p110, %p111
      %p114 = scmp.ne.s32.totalorder %s99, %s113
      %p115 = scmp.eq.s32.totalorder %s26, 0
      %p116 = por %p114, %p115
      %s118 = sadd.s32 %s117, 1
      %p121 = scmp.eq.s32.totalorder %s20, 1
      %p122 = scmp.ne.s32.totalorder %s117, %s119
      %p123 = scmp.eq.s32.totalorder %s20, 0
      %p124 = por %p122, %p123
      %p125 = scmp.ne.s32.totalorder %s117, %s119
      %p126 = scmp.eq.s32.totalorder %s25, 1
      %p127 = por %p125, %p126
      %p128 = scmp.ne.s32.totalorder %s119, %s120
      %p129 = scmp.eq.s32.totalorder %s25, 0
      %p130 = por %p128, %p129
      %p131 = scmp.ne.s32.totalorder %s119, %s120
      %p132 = scmp.eq.s32.totalorder %s26, 1
      %p133 = por %p131, %p132
      %p135 = scmp.ne.s32.totalorder %s120, %s134
      %p136 = scmp.eq.s32.totalorder %s26, 0
      %p137 = por %p135, %p136
      %s139 = sadd.s32 %s138, 1
      %p142 = scmp.eq.s32.totalorder %s20, 1
      %p143 = scmp.ne.s32.totalorder %s138, %s140
      %p144 = scmp.eq.s32.totalorder %s20, 0
      %p145 = por %p143, %p144
      %p146 = scmp.ne.s32.totalorder %s138, %s140
      %p147 = scmp.eq.s32.totalorder %s25, 1
      %p148 = por %p146, %p147
      %p149 = scmp.ne.s32.totalorder %s140, %s141
      %p150 = scmp.eq.s32.totalorder %s25, 0
      %p151 = por %p149, %p150
      %p152 = scmp.ne.s32.totalorder %s140, %s141
      %p153 = scmp.eq.s32.totalorder %s26, 1
      %p154 = por %p152, %p153
      %p156 = scmp.ne.s32.totalorder %s141, %s155
      %p157 = scmp.eq.s32.totalorder %s26, 0
      %p158 = por %p156, %p157
      %s160 = sadd.s32 %s159, 1
      %p163 = scmp.eq.s32.totalorder %s20, 1
      %p164 = scmp.ne.s32.totalorder %s159, %s161
      %p165 = scmp.eq.s32.totalorder %s20, 0
      %p166 = por %p164, %p165
      %p167 = scmp.ne.s32.totalorder %s159, %s161
      %p168 = scmp.eq.s32.totalorder %s25, 1
      %p169 = por %p167, %p168
      %p170 = scmp.ne.s32.totalorder %s161, %s162
      %p171 = scmp.eq.s32.totalorder %s25, 0
      %p172 = por %p170, %p171
      %p173 = scmp.ne.s32.totalorder %s161, %s162
      %p174 = scmp.eq.s32.totalorder %s26, 1
      %p175 = por %p173, %p174
      %p177 = scmp.ne.s32.totalorder %s162, %s176
      %p178 = scmp.eq.s32.totalorder %s26, 0
      %p179 = por %p177, %p178
      %s181 = sadd.s32 %s180, 1
      %p184 = scmp.eq.s32.totalorder %s20, 1
      %p185 = scmp.ne.s32.totalorder %s180, %s182
      %p186 = scmp.eq.s32.totalorder %s20, 0
      %p187 = por %p185, %p186
      %p188 = scmp.ne.s32.totalorder %s180, %s182
      %p189 = scmp.eq.s32.totalorder %s25, 1
      %p190 = por %p188, %p189
      %p191 = scmp.ne.s32.totalorder %s182, %s183
      %p192 = scmp.eq.s32.totalorder %s25, 0
      %p193 = por %p191, %p192
      %p194 = scmp.ne.s32.totalorder %s182, %s183
      %p195 = scmp.eq.s32.totalorder %s26, 1
      %p196 = por %p194, %p195
      %p198 = scmp.ne.s32.totalorder %s183, %s197
      %p199 = scmp.eq.s32.totalorder %s26, 0
      %p200 = por %p198, %p199
      %s201 = ssub.s32 %s27, %s39
      %s202 = ssub.s32 %s28, %s35
      %s203 = sor.u32 %s201, %s202
      %p204 = scmp.eq.s32.totalorder %s203, 0
      %s206 = sadd.s32 %s205, 1
      %s207 = scalar_select %p204, %s205, %s206
      %p210 = pneg %p204
      %p211 = scmp.eq.s32.totalorder %s20, 1
      %p212 = por %p210, %p211
      %p213 = scmp.ne.s32.totalorder %s205, %s208
      %p214 = scmp.eq.s32.totalorder %s20, 0
      %p215 = por %p213, %p214
      %p216 = scmp.ne.s32.totalorder %s205, %s208
      %p217 = scmp.eq.s32.totalorder %s25, 1
      %p218 = por %p216, %p217
      %p219 = scmp.ne.s32.totalorder %s208, %s209
      %p220 = scmp.eq.s32.totalorder %s25, 0
      %p221 = por %p219, %p220
      %p222 = scmp.ne.s32.totalorder %s208, %s209
      %p223 = scmp.eq.s32.totalorder %s26, 1
      %p224 = por %p222, %p223
      %p226 = scmp.ne.s32.totalorder %s209, %s225
      %p227 = scmp.eq.s32.totalorder %s26, 0
      %p228 = por %p226, %p227
      %p229 = scmp.le.s32.totalorder 1, %s20
      %p230 = scmp.lt.s32.totalorder %s20, 3
      %p231 = pnand %p229, %p230
      %p232 = pneg %p231
      // Predicated region
      $region9: #{tpu_custom_call.1} parent=5 // pred_check
        _
      $region10: #{tpu_custom_call.1} parent=5 // pred_check_branch
        %234 = sbr.rel (%p231) target = $region12
      $region11: #{tpu_custom_call.1} parent=5 // pred_region
        %s235 = ssub.s32 %s20, 1
        // Predicated region
        $region13: #{tpu_custom_call.1} parent=11 // pred_check
          %p236 = pneg %p109
        $region14: #{tpu_custom_call.1} parent=11 // pred_check_branch
          %238 = sbr.rel (%p236) target = $region16
        $region15: #{tpu_custom_call.1} parent=11 // pred_region
          _
        $region16: #{tpu_custom_call.1} parent=11 // pred_fallthru
          _
        // Predicated region
        $region17: #{tpu_custom_call.1} parent=11 // pred_check
          %p239 = pneg %p130
        $region18: #{tpu_custom_call.1} parent=11 // pred_check_branch
          %241 = sbr.rel (%p239) target = $region20
        $region19: #{tpu_custom_call.1} parent=11 // pred_region
          _
        $region20: #{tpu_custom_call.1} parent=11 // pred_fallthru
          _
        // Predicated region
        $region21: #{tpu_custom_call.1} parent=11 // pred_check
          %p242 = pneg %p151
        $region22: #{tpu_custom_call.1} parent=11 // pred_check_branch
          %244 = sbr.rel (%p242) target = $region24
        $region23: #{tpu_custom_call.1} parent=11 // pred_region
          _
        $region24: #{tpu_custom_call.1} parent=11 // pred_fallthru
          _
        // Predicated region
        $region25: #{tpu_custom_call.1} parent=11 // pred_check
          %p245 = pneg %p172
        $region26: #{tpu_custom_call.1} parent=11 // pred_check_branch
          %247 = sbr.rel (%p245) target = $region28
        $region27: #{tpu_custom_call.1} parent=11 // pred_region
          _
        $region28: #{tpu_custom_call.1} parent=11 // pred_fallthru
          _
        // Predicated region
        $region29: #{tpu_custom_call.1} parent=11 // pred_check
          %p248 = pneg %p193
        $region30: #{tpu_custom_call.1} parent=11 // pred_check_branch
          %250 = sbr.rel (%p248) target = $region32
        $region31: #{tpu_custom_call.1} parent=11 // pred_region
          _
        $region32: #{tpu_custom_call.1} parent=11 // pred_fallthru
          _
      $region12: #{tpu_custom_call.1} parent=5 // pred_fallthru
        _
      %p251 = scmp.lt.s32.totalorder %s20, 2
      // Predicated region
      $region33: #{tpu_custom_call.1} parent=5 // pred_check
        %p252 = pneg %p251
      $region34: #{tpu_custom_call.1} parent=5 // pred_check_branch
        %254 = sbr.rel (%p252) target = $region36
      $region35: #{tpu_custom_call.1} parent=5 // pred_region
        // Predicated region
        $region37: #{tpu_custom_call.1} parent=35 // pred_check
          %p255 = pneg %p54
        $region38: #{tpu_custom_call.1} parent=35 // pred_check_branch
          %257 = sbr.rel (%p255) target = $region40
        $region39: #{tpu_custom_call.1} parent=35 // pred_region
          %s258 = smul.u32 2, %s28
          %p259 = scmp.lt.s32.totalorder %s27, 1
          %s260 = scalar_select %p259, %s27, 1
          %p261 = scmp.lt.s32.totalorder %s258, 1
          %s262 = scalar_select %p261, %s258, 1
          %s263 = smul.addr %s260, 2
          %s264 = sadd.s32 %s262, %s263
          %s265 = smul.addr %s264, 4
          %s266 = scalar_lea.vmem %s0, %s265
          %s267 = smul.u32 2, %s28
        $region40: #{tpu_custom_call.1} parent=35 // pred_fallthru
          _
        // Predicated region
        $region41: #{tpu_custom_call.1} parent=35 // pred_check
          %p268 = pneg %p82
        $region42: #{tpu_custom_call.1} parent=35 // pred_check_branch
          %270 = sbr.rel (%p268) target = $region44
        $region43: #{tpu_custom_call.1} parent=35 // pred_region
          %s271 = sand.u32 %s72, 1
          %s272 = scalar_lea.sflag [#allocation4], %s271
          %s273 = sand.u32 %s72, 1
          %s274 = smul.addr %s273, 8
          %s275 = scalar_lea.vmem [#allocation3], %s274
          %s276 = smul.u32 2, %s28
          %278 = vsyncadd %s272, 0
          %s279 = smul.addr %s27, 2
          %s280 = sadd.s32 %s276, %s279
          %s281 = smul.addr %s280, 4
          %s282 = scalar_lea.hbm %s1, %s281
          %s284 = sshll.u32 %s282, 4
          %s285 = int_to_ptr.hbm [resolvable:$true] %s284
          %s286 = sshll.u32 %s275, 4
          %s287 = int_to_ptr.vmem [resolvable:$true] %s286
          %289 = dma.hbm_to_vmem [thread:$0]  %s285, 128, %s287, %s272
        $region44: #{tpu_custom_call.1} parent=35 // pred_fallthru
          _
      $region36: #{tpu_custom_call.1} parent=5 // pred_fallthru
        _
      %p290 = scmp.le.s32.totalorder 1, %s20
      %p291 = scmp.lt.s32.totalorder %s20, 3
      %p292 = pnand %p290, %p291
      %p293 = pneg %p292
      // Predicated region
      $region45: #{tpu_custom_call.1} parent=5 // pred_check
        _
      $region46: #{tpu_custom_call.1} parent=5 // pred_check_branch
        %295 = sbr.rel (%p292) target = $region48
      $region47: #{tpu_custom_call.1} parent=5 // pred_region
        %s296 = ssub.s32 %s20, 1
        %s297 = sand.u32 %s75, 1
        %s298 = scalar_lea.sflag [#allocation4], %s297
        %s299 = sand.u32 %s75, 1
        %s300 = smul.addr %s299, 8
        %s301 = scalar_lea.vmem [#allocation3], %s300
        // Predicated region
        $region49: #{tpu_custom_call.1} parent=47 // pred_check
          %p302 = pneg %p88
        $region50: #{tpu_custom_call.1} parent=47 // pred_check_branch
          %304 = sbr.rel (%p302) target = $region52
        $region51: #{tpu_custom_call.1} parent=47 // pred_region
          %306 = dma.done %s298, 128
        $region52: #{tpu_custom_call.1} parent=47 // pred_fallthru
          _
        %s307 = smul.u32 2, %s30
        %p308 = scmp.lt.s32.totalorder %s29, 1
        %s309 = scalar_select %p308, %s29, 1
        %p310 = scmp.lt.s32.totalorder %s307, 1
        %s311 = scalar_select %p310, %s307, 1
        %s312 = smul.addr %s309, 2
        %s313 = sadd.s32 %s311, %s312
        %s314 = smul.addr %s313, 4
        %s315 = scalar_lea.vmem %s0, %s314
        %p316 = pneg %p60
        %p317 = pneg %p57
        %s318 = sand.u32 %s75, 1
        %s319 = scalar_lea.sflag [#allocation4], %s318
        %s320 = sand.u32 %s75, 1
        %s321 = smul.addr %s320, 8
        %s322 = scalar_lea.vmem [#allocation3], %s321
        %p323 = pneg %p88
        %p324 = pneg %p85
        %p325 = pneg %p109
        %p326 = pneg %p106
        %p327 = pneg %p130
        %p328 = pneg %p127
        %p329 = pneg %p151
        %p330 = pneg %p148
        %p331 = pneg %p172
        %p332 = pneg %p169
        %p333 = pneg %p193
        %p334 = pneg %p190
        %p335 = pneg %p221
        %p336 = pneg %p218
        %s337 = sand.u32 %s208, 1
        %s338 = scalar_lea.sflag [#allocation5], %s337
        %s339 = sand.u32 %s208, 1
        %s340 = smul.addr %s339, 8
        %s341 = scalar_lea.vmem [#allocation6], %s340
        %s342 = smul.u32 2, %s30
        %p343 = scmp.lt.s32.totalorder %s29, 1
        %s344 = scalar_select %p343, %s29, 1
        %p345 = scmp.lt.s32.totalorder %s342, 1
        %s346 = scalar_select %p345, %s342, 1
        %s347 = smul.addr %s344, 2
        %s348 = sadd.s32 %s346, %s347
        %s349 = smul.addr %s348, 4
        %s350 = scalar_lea.vmem %s0, %s349
        %s351 = smul.u32 2, %s30
        %s352 = smul.u32 2, %s30
        %s353 = smul.u32 2, %s30
        %v354 = vld [vmem:[%s301] sm:$0xff]
        %v355 = vld [vmem:[%s2] sm:$0xff]
        %v356 = vld [vmem:[%s350] sm:$0xff]
        %v357 = vld [vmem:[%s3] sm:$0xff]
        %359 = vst [vmem:[#allocation1] ss:$2 sm:$0xff] %v354
        %v360 = vld.sshfl [vmem:[#allocation1] sm:$0xff pattern:$0x75316420]
        %v361 = vld.sshfl [vmem:[#allocation1 + $0x8] sm:$0xff pattern:$0x75316420]
        %vm362 = vcmask 31744
        %v364 = vsel %vm362, %v357, 0
        %vm366 = vcmask 1043456
        %v367 = vsel %vm366, %v360, 0
        %v369 = vsel %vm366, %v361, 0
        %371 = vmatpush.msra.mxu0 0.0
        %372 = vmatpush.msra.mxu0 0.0
        %373 = vmatpush.msra.mxu0 0.0
        %374 = vmatpush.msra.mxu0 0.0
        %375 = vmatpush.msra.mxu0 0.0
        %376 = vmatpush.msra.mxu0 0.0
        %377 = vmatpush.msra.mxu0 0.0
        %378 = vmatpush.msra.mxu0 0.0
        %379 = vmatpush.msra.mxu0 0.0
        %380 = vmatpush.msra.mxu0 0.0
        %381 = vmatpush.msra.mxu0 0.0
        %382 = vmatpush.msra.mxu0 0.0
        %383 = vmatpush.msra.mxu0 0.0
        %384 = vmatpush.msra.mxu0 0.0
        %385 = vmatpush.msra.mxu0 0.0
        %386 = vmatpush.msra.mxu0 %v367
        %387 = vmatmul.f32.gmra.mxu0 %v364
        %v388 = vpop.f32.mrf.mxu0
        %v389 = vadd.f32 0.0, %v388
        %390 = vdwg.mxu0
        %391 = vmatpush.msra.mxu0 0.0
        %392 = vmatpush.msra.mxu0 0.0
        %393 = vmatpush.msra.mxu0 0.0
        %394 = vmatpush.msra.mxu0 0.0
        %395 = vmatpush.msra.mxu0 0.0
        %396 = vmatpush.msra.mxu0 0.0
        %397 = vmatpush.msra.mxu0 0.0
        %398 = vmatpush.msra.mxu0 0.0
        %399 = vmatpush.msra.mxu0 0.0
        %400 = vmatpush.msra.mxu0 0.0
        %401 = vmatpush.msra.mxu0 0.0
        %402 = vmatpush.msra.mxu0 0.0
        %403 = vmatpush.msra.mxu0 0.0
        %404 = vmatpush.msra.mxu0 0.0
        %405 = vmatpush.msra.mxu0 0.0
        %406 = vmatpush.msra.mxu0 %v369
        %407 = vmatmul.f32.gmra.mxu0 %v364
        %v408 = vpop.f32.mrf.mxu0
        %v409 = vadd.f32 0.0, %v408
        %410 = vdwg.mxu0
        %412 = vst [vmem:[#allocation1] ss:$2 sm:$0xff] %v356
        %v413 = vld.sshfl [vmem:[#allocation1] sm:$0xff pattern:$0x75316420]
        %v414 = vld.sshfl [vmem:[#allocation1 + $0x8] sm:$0xff pattern:$0x75316420]
        %v416 = vsel %vm362, %v355, 0
        %v418 = vsel %vm366, %v413, 0
        %v420 = vsel %vm366, %v414, 0
        %422 = vmatpush.msra.mxu0 0.0
        %423 = vmatpush.msra.mxu0 0.0
        %424 = vmatpush.msra.mxu0 0.0
        %425 = vmatpush.msra.mxu0 0.0
        %426 = vmatpush.msra.mxu0 0.0
        %427 = vmatpush.msra.mxu0 0.0
        %428 = vmatpush.msra.mxu0 0.0
        %429 = vmatpush.msra.mxu0 0.0
        %430 = vmatpush.msra.mxu0 0.0
        %431 = vmatpush.msra.mxu0 0.0
        %432 = vmatpush.msra.mxu0 0.0
        %433 = vmatpush.msra.mxu0 0.0
        %434 = vmatpush.msra.mxu0 0.0
        %435 = vmatpush.msra.mxu0 0.0
        %436 = vmatpush.msra.mxu0 0.0
        %437 = vmatpush.msra.mxu0 %v418
        %438 = vmatmul.f32.gmra.mxu0 %v416
        %v439 = vpop.f32.mrf.mxu0
        %v440 = vadd.f32 %v389, %v439
        %441 = vdwg.mxu0
        %442 = vmatpush.msra.mxu0 0.0
        %443 = vmatpush.msra.mxu0 0.0
        %444 = vmatpush.msra.mxu0 0.0
        %445 = vmatpush.msra.mxu0 0.0
        %446 = vmatpush.msra.mxu0 0.0
        %447 = vmatpush.msra.mxu0 0.0
        %448 = vmatpush.msra.mxu0 0.0
        %449 = vmatpush.msra.mxu0 0.0
        %450 = vmatpush.msra.mxu0 0.0
        %451 = vmatpush.msra.mxu0 0.0
        %452 = vmatpush.msra.mxu0 0.0
        %453 = vmatpush.msra.mxu0 0.0
        %454 = vmatpush.msra.mxu0 0.0
        %455 = vmatpush.msra.mxu0 0.0
        %456 = vmatpush.msra.mxu0 0.0
        %457 = vmatpush.msra.mxu0 %v420
        %458 = vmatmul.f32.gmra.mxu0 %v416
        %v459 = vpop.f32.mrf.mxu0
        %v460 = vadd.f32 %v409, %v459
        %461 = vdwg.mxu0
        %v462 = vld [vmem:[%s4] sm:$0xff]
        %464 = vset.pattern.permute.xlu0 0
        %465 = vperm.xlu0 %464, %v462
        %v466 = vpop.permute.xlu0 %465
        %v468 = vadd.f32 %v440, %v466
        %v469 = vadd.f32 %v460, %v466
        %v470 = vmax.f32 %v468, 0.0
        %v471 = vmax.f32 %v469, 0.0
        %v472 = vld [vmem:[%s5] sm:$0x1]
        %s473 = sld [smem:[#allocation2]]
        %v474 = vstv %s473
        %vm475 = vcmask 64512
        %v477 = vsel %vm475, %v472, 0
        %479 = vmatpush.msra.mxu0 0.0
        %480 = vmatpush.msra.mxu0 0.0
        %481 = vmatpush.msra.mxu0 0.0
        %482 = vmatpush.msra.mxu0 0.0
        %483 = vmatpush.msra.mxu0 0.0
        %484 = vmatpush.msra.mxu0 0.0
        %485 = vmatpush.msra.mxu0 0.0
        %486 = vmatpush.msra.mxu0 0.0
        %487 = vmatpush.msra.mxu0 0.0
        %488 = vmatpush.msra.mxu0 0.0
        %489 = vmatpush.msra.mxu0 0.0
        %490 = vmatpush.msra.mxu0 0.0
        %491 = vmatpush.msra.mxu0 0.0
        %492 = vmatpush.msra.mxu0 0.0
        %493 = vmatpush.msra.mxu0 0.0
        %494 = vmatpush.msra.mxu0 %v470
        %495 = vmatmul.f32.gmra.mxu0 %v477
        %v496 = vpop.f32.mrf.mxu0
        %v497 = vadd.f32 %v474, %v496
        %498 = vdwg.mxu0
        %499 = vmatpush.msra.mxu0 0.0
        %500 = vmatpush.msra.mxu0 0.0
        %501 = vmatpush.msra.mxu0 0.0
        %502 = vmatpush.msra.mxu0 0.0
        %503 = vmatpush.msra.mxu0 0.0
        %504 = vmatpush.msra.mxu0 0.0
        %505 = vmatpush.msra.mxu0 0.0
        %506 = vmatpush.msra.mxu0 0.0
        %507 = vmatpush.msra.mxu0 0.0
        %508 = vmatpush.msra.mxu0 0.0
        %509 = vmatpush.msra.mxu0 0.0
        %510 = vmatpush.msra.mxu0 0.0
        %511 = vmatpush.msra.mxu0 0.0
        %512 = vmatpush.msra.mxu0 0.0
        %513 = vmatpush.msra.mxu0 0.0
        %514 = vmatpush.msra.mxu0 %v471
        %515 = vmatmul.f32.gmra.mxu0 %v477
        %v516 = vpop.f32.mrf.mxu0
        %v517 = vadd.f32 %v474, %v516
        %518 = vdwg.mxu0
        %v519 = vxor.u32 %v497, 2147483648
        %v520 = vxor.u32 %v517, 2147483648
        %v521 = vmul.f32 %v519, 1.442695
        %v522 = vpow.pop %v521
        %v523 = vmul.f32 %v520, 1.442695
        %v524 = vpow.pop %v523
        %v525 = vadd.f32 %v522, 1.0
        %v526 = vadd.f32 %v524, 1.0
        %v527 = vrcp.pop %v525
        %v528 = vmul.f32 %v525, %v527
        %v529 = vsub.f32 1.0, %v528
        %v530 = vmul.f32 %v527, %v529
        %v531 = vadd.f32 %v527, %v530
        %vm532 = vweird.f32 %v525
        %vm533 = vweird.f32 %v527
        %vm534 = vmor %vm532, %vm533
        %v535 = vsel %vm534, %v527, %v531
        %v536 = vand.u32 2147483647, %v525
        %vm537 = vcmp.eq.f32.partialorder %v536, 8.507059e+37
        %v538 = vand.u32 %v525, 2147483648
        %v539 = vor.u32 1.1754944e-38, %v538
        %v540 = vsel %vm537, %v539, %v535
        %v541 = vmul.f32 1.0, %v540
        %v542 = vrcp.pop %v526
        %v543 = vmul.f32 %v526, %v542
        %v544 = vsub.f32 1.0, %v543
        %v545 = vmul.f32 %v542, %v544
        %v546 = vadd.f32 %v542, %v545
        %vm547 = vweird.f32 %v526
        %vm548 = vweird.f32 %v542
        %vm549 = vmor %vm547, %vm548
        %v550 = vsel %vm549, %v542, %v546
        %v551 = vand.u32 2147483647, %v526
        %vm552 = vcmp.eq.f32.partialorder %v551, 8.507059e+37
        %v553 = vand.u32 %v526, 2147483648
        %v554 = vor.u32 1.1754944e-38, %v553
        %v555 = vsel %vm552, %v554, %v550
        %v556 = vmul.f32 1.0, %v555
        %v557 = vperm.slane %v541, 0
        %v558 = vperm.slane %v556, 0
        %v561 = vrot.slane %v558, 4
        %v562 = vsel %vm366, %v557, %v561
        %v564 = vmul.f32 %v354, %v562
        %565 = vst [vmem:[%s341] sm:$0xff] %v564
        %s566 = sand.u32 %s208, 1
        %s567 = scalar_lea.sflag [#allocation5], %s566
        %s568 = sand.u32 %s208, 1
        %s569 = smul.addr %s568, 8
        %s570 = scalar_lea.vmem [#allocation6], %s569
        // Predicated region
        $region53: #{tpu_custom_call.1} parent=47 // pred_check
          %p571 = pneg %p218
        $region54: #{tpu_custom_call.1} parent=47 // pred_check_branch
          %573 = sbr.rel (%p571) target = $region56
        $region55: #{tpu_custom_call.1} parent=47 // pred_region
          %s574 = smul.u32 2, %s30
          %576 = vsyncadd %s567, 0
          %s577 = smul.addr %s29, 2
          %s578 = sadd.s32 %s574, %s577
          %s579 = smul.addr %s578, 4
          %s580 = scalar_lea.hbm %s7, %s579
          %s582 = sshll.u32 %s570, 4
          %s583 = int_to_ptr.vmem [resolvable:$true] %s582
          %s584 = sshll.u32 %s580, 4
          %s585 = int_to_ptr.hbm [resolvable:$true] %s584
          %587 = dma.vmem_to_hbm [thread:$0]  %s583, 128, %s585, %s567
        $region56: #{tpu_custom_call.1} parent=47 // pred_fallthru
          _
      $region48: #{tpu_custom_call.1} parent=5 // pred_fallthru
        _
      %p588 = scmp.le.s32.totalorder 2, %s20
      // Predicated region
      $region57: #{tpu_custom_call.1} parent=5 // pred_check
        %p589 = pneg %p588
      $region58: #{tpu_custom_call.1} parent=5 // pred_check_branch
        %591 = sbr.rel (%p589) target = $region60
      $region59: #{tpu_custom_call.1} parent=5 // pred_region
        %s592 = ssub.s32 %s20, 2
        // Predicated region
        $region61: #{tpu_custom_call.1} parent=59 // pred_check
          %p593 = pneg %p224
        $region62: #{tpu_custom_call.1} parent=59 // pred_check_branch
          %595 = sbr.rel (%p593) target = $region64
        $region63: #{tpu_custom_call.1} parent=59 // pred_region
          %s596 = sand.u32 %s209, 1
          %s597 = scalar_lea.sflag [#allocation5], %s596
          %s598 = sand.u32 %s209, 1
          %s599 = smul.addr %s598, 8
          %s600 = scalar_lea.vmem [#allocation6], %s599
          %602 = dma.done %s597, 128
        $region64: #{tpu_custom_call.1} parent=59 // pred_fallthru
          _
      $region60: #{tpu_custom_call.1} parent=5 // pred_fallthru
        _
    $region6: #{tpu_custom_call.1} parent=1 // loop_footer
      %s24 = sadd.s32 1, %s20
    $region7: #{tpu_custom_call.1} parent=1 // loop_footer_branch
      %19 = sbr.rel target = $region3
    $region8: #{tpu_custom_call.1} parent=1 // loop_exit
      _
    %603 = vsyncpa [#allocation4], 1
    %s604 = scalar_lea.sflag [#allocation4], 1
    %605 = vsyncpa %s604, 1
    %606 = vsyncpa [#allocation5], 1
    %s607 = scalar_lea.sflag [#allocation5], 1
    %608 = vsyncpa %s607, 1

</llo_original>
